<compile_context>
chip_gen: v6e
topology: v6e:2x2x1
jax: 0.10.0
libtpu: 0.0.40
codegen_flags: <defaults>
</compile_context>

<pallas_src>
import functools

import jax
import jax.numpy as jnp
from jax.experimental import pallas as pl
from jax.experimental.pallas import tpu as pltpu


def _channel_shuffle_kernel(x_ref, o_ref, *, row_map, identity):
    # x_ref / o_ref: (b*C, hw_tile) lane-dense slabs resident in VMEM.
    if identity:
        o_ref[...] = x_ref[...]
        return
    # row_map is a static tuple: output row r comes from input row row_map[r].
    for r_out, r_in in enumerate(row_map):
        o_ref[pl.ds(r_out, 1), :] = x_ref[pl.ds(r_in, 1), :]


def _pick_hw_tile(bc, hw, itemsize, vmem_budget_bytes=16 * 1024 * 1024):
    """Largest lane-dense tile of the flattened H*W axis that fits VMEM."""
    # in + out blocks, double-buffered by the pipeline -> ~4 resident copies.
    def fits(t):
        return 4 * bc * t * itemsize <= vmem_budget_bytes

    if fits(hw):
        return hw  # whole slab in one step (block == full array: always legal)
    if hw % 128 != 0:
        # TODO(synk): handle the (huge AND non-lane-aligned H*W) case with a
        # padded remainder tile; not needed for shapes this module sees.
        return hw
    tile = hw
    while tile > 128 and (hw % tile != 0 or not fits(tile)):
        tile -= 128
    return tile


def channel_shuffle(x, groups):
    b, c, h, w = x.shape
    assert c % groups == 0, "channels must be divisible by groups"
    cpg = c // groups
    hw = h * w
    bc = b * c

    x_flat = x.reshape(bc, hw)

    # Static permutation: out row (bb*c + j*groups + i) <- in row (bb*c + i*cpg + j)
    row_map = tuple(
        bb * c + i * cpg + j
        for bb in range(b)
        for j in range(cpg)
        for i in range(groups)
    )
    identity = (groups == 1) or (cpg == 1)

    hw_tile = _pick_hw_tile(bc, hw, x.dtype.itemsize)
    n_tiles = pl.cdiv(hw, hw_tile)

    kernel = functools.partial(
        _channel_shuffle_kernel, row_map=row_map, identity=identity)
    out = pl.pallas_call(
        kernel,
        out_shape=jax.ShapeDtypeStruct((bc, hw), x.dtype),
        grid_spec=pltpu.PrefetchScalarGridSpec(
            num_scalar_prefetch=0,
            grid=(n_tiles,),                              # 1 step at test shape
            in_specs=[pl.BlockSpec((bc, hw_tile), lambda t: (0, t))],
            out_specs=pl.BlockSpec((bc, hw_tile), lambda t: (0, t)),
        ),
        compiler_params=pltpu.CompilerParams(
            dimension_semantics=("parallel",)),           # tiles are independent
    )(x_flat)
    return out.reshape(b, c, h, w)


def reference(x, groups):
    """Pure-JAX mirror of the PyTorch ChannelShuffle forward."""
    b, c, h, w = x.shape
    cpg = c // groups
    return jnp.transpose(
        x.reshape(b, groups, cpg, h, w), (0, 2, 1, 3, 4)
    ).reshape(b, c, h, w)


if __name__ == "__main__":
    key = jax.random.PRNGKey(0)
    b, c, h, w = 2, 4, 16, 16
    groups = 2

    x = jax.random.normal(key, (b, c, h, w), jnp.float32)

    y = jax.block_until_ready(channel_shuffle(x, groups))
    y_ref = reference(x, groups)

    assert y.shape == x.shape
    assert jnp.array_equal(y, y_ref), "Pallas result mismatch"
    print("KERNEL_OK")
</pallas_src>

<mosaic_0001>
module attributes {stable_mosaic.version = 11 : i64} {
  func.func @_channel_shuffle_kernel(%arg0: i32, %arg1: memref<8x256xf32, #tpu.memory_space<vmem>>, %arg2: memref<8x256xf32, #tpu.memory_space<vmem>>) attributes {dimension_semantics = [#tpu.dimension_semantics<parallel>], iteration_bounds = array<i64: 1>, scalar_prefetch = 0 : i64, scratch_operands = 0 : i64, tpu.core_type = #tpu.core_type<tc>, window_params = [{transform_indices = @transform_0, window_bounds = array<i64: 8, 256>}, {transform_indices = @transform_1, window_bounds = array<i64: 8, 256>}]} {
    %c0 = arith.constant 0 : index
    %c0_0 = arith.constant 0 : index
    %0 = vector.load %arg1[%c0, %c0_0] : memref<8x256xf32, #tpu.memory_space<vmem>>, vector<1x256xf32>
    %c0_1 = arith.constant 0 : index
    %c0_2 = arith.constant 0 : index
    %1 = vector.load %arg2[%c0_1, %c0_2] : memref<8x256xf32, #tpu.memory_space<vmem>>, vector<1x256xf32>
    tpu.vector_store %arg2[%c0_1, %c0_2], %0 {strides = array<i32>} : memref<8x256xf32, #tpu.memory_space<vmem>>, vector<1x256xf32>,
    %c2 = arith.constant 2 : index
    %c0_3 = arith.constant 0 : index
    %2 = vector.load %arg1[%c2, %c0_3] : memref<8x256xf32, #tpu.memory_space<vmem>>, vector<1x256xf32>
    %c1 = arith.constant 1 : index
    %c0_4 = arith.constant 0 : index
    %3 = vector.load %arg2[%c1, %c0_4] : memref<8x256xf32, #tpu.memory_space<vmem>>, vector<1x256xf32>
    tpu.vector_store %arg2[%c1, %c0_4], %2 {strides = array<i32>} : memref<8x256xf32, #tpu.memory_space<vmem>>, vector<1x256xf32>,
    %c1_5 = arith.constant 1 : index
    %c0_6 = arith.constant 0 : index
    %4 = vector.load %arg1[%c1_5, %c0_6] : memref<8x256xf32, #tpu.memory_space<vmem>>, vector<1x256xf32>
    %c2_7 = arith.constant 2 : index
    %c0_8 = arith.constant 0 : index
    %5 = vector.load %arg2[%c2_7, %c0_8] : memref<8x256xf32, #tpu.memory_space<vmem>>, vector<1x256xf32>
    tpu.vector_store %arg2[%c2_7, %c0_8], %4 {strides = array<i32>} : memref<8x256xf32, #tpu.memory_space<vmem>>, vector<1x256xf32>,
    %c3 = arith.constant 3 : index
    %c0_9 = arith.constant 0 : index
    %6 = vector.load %arg1[%c3, %c0_9] : memref<8x256xf32, #tpu.memory_space<vmem>>, vector<1x256xf32>
    %c3_10 = arith.constant 3 : index
    %c0_11 = arith.constant 0 : index
    %7 = vector.load %arg2[%c3_10, %c0_11] : memref<8x256xf32, #tpu.memory_space<vmem>>, vector<1x256xf32>
    tpu.vector_store %arg2[%c3_10, %c0_11], %6 {strides = array<i32>} : memref<8x256xf32, #tpu.memory_space<vmem>>, vector<1x256xf32>,
    %c4 = arith.constant 4 : index
    %c0_12 = arith.constant 0 : index
    %8 = vector.load %arg1[%c4, %c0_12] : memref<8x256xf32, #tpu.memory_space<vmem>>, vector<1x256xf32>
    %c4_13 = arith.constant 4 : index
    %c0_14 = arith.constant 0 : index
    %9 = vector.load %arg2[%c4_13, %c0_14] : memref<8x256xf32, #tpu.memory_space<vmem>>, vector<1x256xf32>
    tpu.vector_store %arg2[%c4_13, %c0_14], %8 {strides = array<i32>} : memref<8x256xf32, #tpu.memory_space<vmem>>, vector<1x256xf32>,
    %c6 = arith.constant 6 : index
    %c0_15 = arith.constant 0 : index
    %10 = vector.load %arg1[%c6, %c0_15] : memref<8x256xf32, #tpu.memory_space<vmem>>, vector<1x256xf32>
    %c5 = arith.constant 5 : index
    %c0_16 = arith.constant 0 : index
    %11 = vector.load %arg2[%c5, %c0_16] : memref<8x256xf32, #tpu.memory_space<vmem>>, vector<1x256xf32>
    tpu.vector_store %arg2[%c5, %c0_16], %10 {strides = array<i32>} : memref<8x256xf32, #tpu.memory_space<vmem>>, vector<1x256xf32>,
    %c5_17 = arith.constant 5 : index
    %c0_18 = arith.constant 0 : index
    %12 = vector.load %arg1[%c5_17, %c0_18] : memref<8x256xf32, #tpu.memory_space<vmem>>, vector<1x256xf32>
    %c6_19 = arith.constant 6 : index
    %c0_20 = arith.constant 0 : index
    %13 = vector.load %arg2[%c6_19, %c0_20] : memref<8x256xf32, #tpu.memory_space<vmem>>, vector<1x256xf32>
    tpu.vector_store %arg2[%c6_19, %c0_20], %12 {strides = array<i32>} : memref<8x256xf32, #tpu.memory_space<vmem>>, vector<1x256xf32>,
    %c7 = arith.constant 7 : index
    %c0_21 = arith.constant 0 : index
    %14 = vector.load %arg1[%c7, %c0_21] : memref<8x256xf32, #tpu.memory_space<vmem>>, vector<1x256xf32>
    %c7_22 = arith.constant 7 : index
    %c0_23 = arith.constant 0 : index
    %15 = vector.load %arg2[%c7_22, %c0_23] : memref<8x256xf32, #tpu.memory_space<vmem>>, vector<1x256xf32>
    tpu.vector_store %arg2[%c7_22, %c0_23], %14 {strides = array<i32>} : memref<8x256xf32, #tpu.memory_space<vmem>>, vector<1x256xf32>,
    return
  }
  func.func @transform_0(%arg0: i32) -> (i32, i32) {
    %c0_i32 = arith.constant 0 : i32
    %c0_i32_0 = arith.constant 0 : i32
    return %c0_i32, %arg0 : i32, i32
  }
  func.func @transform_1(%arg0: i32) -> (i32, i32) {
    %c0_i32 = arith.constant 0 : i32
    %c0_i32_0 = arith.constant 0 : i32
    return %c0_i32, %arg0 : i32, i32
  }
}

</mosaic_0001>

<llo_original>
// kernel: tpu_custom_call.1
$region0: #{tpu_custom_call.1}
  #allocation0 [shape = 'u32[]', space=smem, size = 0x4, offset = 0x4, fixed_abs, tag = 'smem constant byte address 0x4 - core index']
  #allocation1 [shape = 'u32[144,128]{1,0:T(1,128)}', space=vmem, size = 0x12000, scoped, tag = 'internal scratch']
  %s0 = inlined_call_operand.hbm [shape: f32[8,256], index: 0, kind: input, shape index: {}]
  %s1 = inlined_call_operand.hbm [shape: f32[8,256], index: 1, kind: output, shape index: {}]
  %s2 = sld [smem:[#allocation0]]
  $region18: #{tpu_custom_call.1} parent=0
    _
  %s4 = ssub.s32 1, %s2
  %s5 = scalar_select 0, %s4, %s2
  $region1: #{tpu_custom_call.1} parent=0
    #allocation2 [shape = 'u8[8192]{0}', space=vmem, size = 0x2000, scoped, tag = 'input window, operand 0, single buffered']
    #allocation3 [shape = 's32[1]{0}', space=sflag, size = 0x4, scoped, tag = 'scoped memory for tpu_custom_call.1']
    #allocation4 [shape = 's32[1]{0}', space=sflag, size = 0x4, scoped, tag = 'scoped memory for tpu_custom_call.1']
    #allocation5 [shape = 'u8[8192]{0}', space=vmem, size = 0x2000, scoped, tag = 'output window, operand 0, single buffered']
    %6 = vsyncpa [#allocation3], 0
    %7 = vsyncpa [#allocation4], 0
    // Predicated region
    $region2: #{tpu_custom_call.1} parent=1 // pred_check
      _
    $region3: #{tpu_custom_call.1} parent=1 // pred_check_branch
      %9 = sbr.rel (0) target = $region5
    $region4: #{tpu_custom_call.1} parent=1 // pred_region
      %s11 = ssub.s32 256, 256
      %12 = vsyncadd [#allocation3], %s11
      %s14 = sshll.u32 [#allocation2], 4
      %s15 = int_to_ptr.vmem [resolvable:$true] %s14
      %17 = dma.hbm_to_vmem [thread:$0]  %s0, 256, %s15, [#allocation3]
    $region5: #{tpu_custom_call.1} parent=1 // pred_fallthru
      _
    // Predicated region
    $region6: #{tpu_custom_call.1} parent=1 // pred_check
      _
    $region7: #{tpu_custom_call.1} parent=1 // pred_check_branch
      %19 = sbr.rel (0) target = $region9
    $region8: #{tpu_custom_call.1} parent=1 // pred_region
      %20 = dma.done [#allocation3], 256
    $region9: #{tpu_custom_call.1} parent=1 // pred_fallthru
      _
    %v21 = vld [vmem:[#allocation2] ss:$8 sm:$0x3]
    %v22 = vlaneseq
    %vm23 = vcmp.ge.s32.totalorder %v22, 0
    %vm24 = vcmp.lt.s32.totalorder %v22, 256
    %vm25 = vmand %vm23, %vm24
    %26 = vst.msk [vmem:[#allocation5] ss:$8 sm:$0x3] %vm25, %v21
    %27 = vst.msk [vmem:[#allocation5] ss:$8 sm:$0x0] %vm25, %v21
    %s28 = scalar_lea.vmem [#allocation2], 2
    %v29 = vld [vmem:[%s28] ss:$8 sm:$0x3]
    %s30 = scalar_lea.vmem [#allocation5], 1
    %31 = vst.msk [vmem:[%s30] ss:$8 sm:$0x3] %vm25, %v29
    %32 = vst.msk [vmem:[%s30] ss:$8 sm:$0x0] %vm25, %v29
    %s33 = scalar_lea.vmem [#allocation2], 1
    %v34 = vld [vmem:[%s33] ss:$8 sm:$0x3]
    %s35 = scalar_lea.vmem [#allocation5], 2
    %36 = vst.msk [vmem:[%s35] ss:$8 sm:$0x3] %vm25, %v34
    %37 = vst.msk [vmem:[%s35] ss:$8 sm:$0x0] %vm25, %v34
    %s38 = scalar_lea.vmem [#allocation2], 3
    %v39 = vld [vmem:[%s38] ss:$8 sm:$0x3]
    %s40 = scalar_lea.vmem [#allocation5], 3
    %41 = vst.msk [vmem:[%s40] ss:$8 sm:$0x3] %vm25, %v39
    %42 = vst.msk [vmem:[%s40] ss:$8 sm:$0x0] %vm25, %v39
    %s43 = scalar_lea.vmem [#allocation2], 4
    %v44 = vld [vmem:[%s43] ss:$8 sm:$0x3]
    %s45 = scalar_lea.vmem [#allocation5], 4
    %46 = vst.msk [vmem:[%s45] ss:$8 sm:$0x3] %vm25, %v44
    %47 = vst.msk [vmem:[%s45] ss:$8 sm:$0x0] %vm25, %v44
    %s48 = scalar_lea.vmem [#allocation2], 6
    %v49 = vld [vmem:[%s48] ss:$8 sm:$0x3]
    %s50 = scalar_lea.vmem [#allocation5], 5
    %51 = vst.msk [vmem:[%s50] ss:$8 sm:$0x3] %vm25, %v49
    %52 = vst.msk [vmem:[%s50] ss:$8 sm:$0x0] %vm25, %v49
    %s53 = scalar_lea.vmem [#allocation2], 5
    %v54 = vld [vmem:[%s53] ss:$8 sm:$0x3]
    %s55 = scalar_lea.vmem [#allocation5], 6
    %56 = vst.msk [vmem:[%s55] ss:$8 sm:$0x3] %vm25, %v54
    %57 = vst.msk [vmem:[%s55] ss:$8 sm:$0x0] %vm25, %v54
    %s58 = scalar_lea.vmem [#allocation2], 7
    %v59 = vld [vmem:[%s58] ss:$8 sm:$0x3]
    %s60 = scalar_lea.vmem [#allocation5], 7
    %61 = vst.msk [vmem:[%s60] ss:$8 sm:$0x3] %vm25, %v59
    %62 = vst.msk [vmem:[%s60] ss:$8 sm:$0x0] %vm25, %v59
    // Predicated region
    $region10: #{tpu_custom_call.1} parent=1 // pred_check
      _
    $region11: #{tpu_custom_call.1} parent=1 // pred_check_branch
      %64 = sbr.rel (0) target = $region13
    $region12: #{tpu_custom_call.1} parent=1 // pred_region
      %s66 = ssub.s32 256, 256
      %67 = vsyncadd [#allocation4], %s66
      %s69 = sshll.u32 [#allocation5], 4
      %s70 = int_to_ptr.vmem [resolvable:$true] %s69
      %72 = dma.vmem_to_hbm [thread:$0]  %s70, 256, %s1, [#allocation4]
    $region13: #{tpu_custom_call.1} parent=1 // pred_fallthru
      _
    // Predicated region
    $region14: #{tpu_custom_call.1} parent=1 // pred_check
      _
    $region15: #{tpu_custom_call.1} parent=1 // pred_check_branch
      %74 = sbr.rel (0) target = $region17
    $region16: #{tpu_custom_call.1} parent=1 // pred_region
      %75 = dma.done [#allocation4], 256
    $region17: #{tpu_custom_call.1} parent=1 // pred_fallthru
      _
    %76 = vsyncpa [#allocation3], 1
    %77 = vsyncpa [#allocation4], 1

</llo_original>
